<compile_context>
chip_gen: v7x
topology: tpu7x:2x2x1
jax: 0.10.0
libtpu: 0.0.40
codegen_flags: <defaults>
</compile_context>

<pallas_src>
import jax
import jax.numpy as jnp
from jax.experimental import pallas as pl
from jax.experimental.pallas import tpu as pltpu


def _rownorm_kernel(x_ref, o_ref):
    # Replicates X.float(); the HBM read stays in the input dtype so bf16
    # inputs only move 2 B/elem on the load path.
    x = x_ref[...].astype(jnp.float32)
    # L1 norm along dim=1 (lane axis), clamped at eps like F.normalize.
    denom = jnp.maximum(jnp.sum(jnp.abs(x), axis=1, keepdims=True), 1e-12)
    # Per-row reciprocal of the (tile_rows, 1) column + broadcast multiply
    # instead of a full-tile divide.  approx=True would move it onto the EUP
    # slot; the exact form costs ~1 op/row and keeps parity with torch.
    inv = pl.reciprocal(denom, approx=False)
    # isinf mask dropped: provably dead for finite inputs, and +-inf inputs
    # produce NaN (inf/inf) which torch's mask also leaves -- identical output.
    o_ref[...] = (x * inv).astype(o_ref.dtype)


def _round_up(x, m):
    return ((x + m - 1) // m) * m


def _vmem_limit_bytes():
    # Generation-aware scoped-VMEM limit: ~48 MiB on 128 MiB chips (v5e/v6e),
    # ~40 MiB on 64 MiB-per-TC chips (v7x).
    try:
        cap = int(pltpu.get_tpu_info().vmem_capacity_bytes)
    except Exception:
        cap = 64 << 20  # conservative (v7x per-TC)
    return int(min(48 << 20, max(32 << 20, (cap * 5) // 8)))


def _num_tensorcores():
    # Best-effort TensorCores-per-chip (v7x: 2, v5e/v6e: 1); default 1 keeps
    # behaviour correct everywhere if the query is unavailable.
    try:
        info = pltpu.get_tpu_info()
        for attr in ("num_cores", "num_tensorcores", "core_count"):
            v = getattr(info, attr, None)
            if isinstance(v, int) and v >= 1:
                return v
    except Exception:
        pass
    try:
        dev = jax.devices()[0]
        v = getattr(dev, "num_cores", None)
        if isinstance(v, int) and v >= 1:
            return v
        kind = str(getattr(dev, "device_kind", "")).lower()
        if "v7" in kind or "7x" in kind:
            return 2
    except Exception:
        pass
    return 1


def _choose_tile_rows(N, D, in_bytes, out_bytes, vmem_limit, num_cores):
    # Packed sublane count of the input dtype (full vreg packing on load).
    pack = {1: 32, 2: 16, 4: 8}.get(in_bytes, 8)
    if N <= pack:
        return N  # one block whose dims equal the full array dims (always legal)
    # Per-row VMEM: double-buffered in/out pipeline buffers plus ~2 f32 tiles
    # of in-kernel temporaries (the .float() upcast and the scaled result).
    per_row = 2 * D * (in_bytes + out_bytes) + 2 * 4 * D
    budget = max(pack * per_row, vmem_limit - (8 << 20))  # keep headroom
    tile = min(1024, max(pack, (budget // per_row) // pack * pack))
    # Multi-TC chips (v7x): >= 2 grid steps per core so the parallel axis
    # shards across cores and each core still overlaps DMA with compute.
    # Single-TC chips (v5e/v6e): a single-step grid avoids per-step overhead.
    min_steps = 2 * num_cores if num_cores > 1 else 1
    if min_steps <= 1 and tile >= N:
        return N  # one lane-dense step covering every row
    if min_steps > 1:
        tile = min(tile, max(pack, _round_up(-(-N // min_steps), pack)))
    # Multi-step grid: tile stays a multiple of the sublane pack; the last
    # (ragged) block's OOB rows are masked on writeback.
    return max(pack, min(tile, (N // pack) * pack))


def row_norm(x, tile_rows=None, out_dtype=None):
    """L1 row-normalize x along dim=1; default float32 output (torch .float())."""
    N, D = x.shape
    in_bytes = jnp.dtype(x.dtype).itemsize
    out_dtype = jnp.float32 if out_dtype is None else jnp.dtype(out_dtype)
    out_bytes = jnp.dtype(out_dtype).itemsize

    vmem_limit = _vmem_limit_bytes()
    if tile_rows is None:
        tile_rows = _choose_tile_rows(N, D, in_bytes, out_bytes, vmem_limit,
                                      _num_tensorcores())
    grid = (pl.cdiv(N, tile_rows),)

    # Advisory cost hint so XLA can schedule/overlap neighbouring HLOs.
    cost = pl.CostEstimate(flops=4 * N * D, transcendentals=N,
                           bytes_accessed=N * D * (in_bytes + out_bytes))

    return pl.pallas_call(
        _rownorm_kernel,
        out_shape=jax.ShapeDtypeStruct((N, D), out_dtype),
        grid_spec=pltpu.PrefetchScalarGridSpec(
            num_scalar_prefetch=0,
            grid=grid,
            in_specs=[pl.BlockSpec((tile_rows, D), lambda i: (i, 0))],
            out_specs=pl.BlockSpec((tile_rows, D), lambda i: (i, 0)),
        ),
        compiler_params=pltpu.CompilerParams(
            dimension_semantics=("parallel",),
            vmem_limit_bytes=vmem_limit,
        ),
        cost_estimate=cost,
        # input_output_aliases={0: 0} is only profitable when in/out dtypes
        # match AND the caller donates x; left off so non-donated calls don't
        # pay an extra defensive copy.
    )(x)


def _reference(x):
    xf = x.astype(jnp.float32)
    denom = jnp.maximum(jnp.sum(jnp.abs(xf), axis=1, keepdims=True), 1e-12)
    y = xf / denom
    return jnp.where(jnp.isinf(y), 0.0, y)  # torch parity (no-op for finite x)


if __name__ == "__main__":
    key = jax.random.PRNGKey(0)
    k1, k2, k3 = jax.random.split(key, 3)

    # Test 1: bf16 input (exercises the .float() upcast) with an all-zero row
    # hitting the eps clamp.  D multiple of 128 -> fully lane-dense stores.
    N1, D1 = 16, 128
    x1 = jax.random.normal(k1, (N1, D1), dtype=jnp.bfloat16)
    x1 = x1.at[3].set(jnp.zeros((D1,), dtype=jnp.bfloat16))
    out1 = jax.block_until_ready(row_norm(x1))
    ref1 = _reference(x1)
    assert out1.shape == (N1, D1) and out1.dtype == jnp.float32
    assert jnp.allclose(out1, ref1, atol=1e-5, rtol=1e-5)

    # Test 2: f32 input with N and D aligned to neither the sublane pack nor
    # the 128-lane tile; handled with ragged blocks, no wrapper pad/slice.
    N2, D2 = 10, 96
    x2 = jax.random.normal(k2, (N2, D2), dtype=jnp.float32)
    out2 = jax.block_until_ready(row_norm(x2))
    ref2 = _reference(x2)
    assert out2.shape == (N2, D2) and out2.dtype == jnp.float32
    assert jnp.allclose(out2, ref2, atol=1e-5, rtol=1e-5)

    # Test 3: forced small tile -> multi-step grid with a ragged last block
    # (20 rows, tile 8 -> 3 steps, last step masks 4 OOB rows on writeback).
    N3, D3 = 20, 128
    x3 = jax.random.normal(k3, (N3, D3), dtype=jnp.float32)
    out3 = jax.block_until_ready(row_norm(x3, tile_rows=8))
    ref3 = _reference(x3)
    assert out3.shape == (N3, D3)
    assert jnp.allclose(out3, ref3, atol=1e-5, rtol=1e-5)

    # Test 4: relaxed-contract bf16 output (halves HBM writeback traffic).
    out4 = jax.block_until_ready(row_norm(x1, out_dtype=jnp.bfloat16))
    assert out4.dtype == jnp.bfloat16
    assert jnp.allclose(out4.astype(jnp.float32), ref1, atol=1e-2, rtol=1e-2)

    print("KERNEL_OK")
</pallas_src>

<mosaic_0001>
module attributes {stable_mosaic.version = 11 : i64} {
  func.func @_rownorm_kernel(%arg0: i32, %arg1: memref<16x128xbf16, #tpu.memory_space<vmem>>, %arg2: memref<16x128xf32, #tpu.memory_space<vmem>>) attributes {dimension_semantics = [#tpu.dimension_semantics<parallel>], iteration_bounds = array<i64: 1>, scalar_prefetch = 0 : i64, scratch_operands = 0 : i64, tpu.core_type = #tpu.core_type<tc>, window_params = [{transform_indices = @transform_0, window_bounds = array<i64: 16, 128>}, {transform_indices = @transform_1, window_bounds = array<i64: 16, 128>}]} {
    %c0 = arith.constant 0 : index
    %c0_0 = arith.constant 0 : index
    %0 = vector.load %arg1[%c0, %c0_0] : memref<16x128xbf16, #tpu.memory_space<vmem>>, vector<16x128xbf16>
    %1 = arith.extf %0 : vector<16x128xbf16> to vector<16x128xf32>
    %2 = math.absf %1 : vector<16x128xf32>
    %cst = arith.constant dense<0.000000e+00> : vector<16xf32>
    %3 = vector.multi_reduction <add>, %2, %cst [1] : vector<16x128xf32> to vector<16xf32>
    %4 = vector.shape_cast %3 : vector<16xf32> to vector<16x1xf32>
    %cst_1 = arith.constant 9.99999996E-13 : f32
    %5 = vector.broadcast %cst_1 : f32 to vector<16x1xf32>
    %6 = arith.maximumf %4, %5 : vector<16x1xf32>
    %7 = tpu.reciprocal %6 : vector<16x1xf32> -> vector<16x1xf32>
    %8 = vector.broadcast %7 : vector<16x1xf32> to vector<16x128xf32>
    %9 = arith.mulf %1, %8 : vector<16x128xf32>
    %c0_2 = arith.constant 0 : index
    %c0_3 = arith.constant 0 : index
    %10 = vector.load %arg2[%c0_2, %c0_3] : memref<16x128xf32, #tpu.memory_space<vmem>>, vector<16x128xf32>
    tpu.vector_store %arg2[%c0_2, %c0_3], %9 {strides = array<i32>} : memref<16x128xf32, #tpu.memory_space<vmem>>, vector<16x128xf32>,
    return
  }
  func.func @transform_0(%arg0: i32) -> (i32, i32) {
    %c0_i32 = arith.constant 0 : i32
    %c0_i32_0 = arith.constant 0 : i32
    return %arg0, %c0_i32 : i32, i32
  }
  func.func @transform_1(%arg0: i32) -> (i32, i32) {
    %c0_i32 = arith.constant 0 : i32
    %c0_i32_0 = arith.constant 0 : i32
    return %arg0, %c0_i32 : i32, i32
  }
}

</mosaic_0001>

<llo_original>
// kernel: tpu_custom_call.1
$region0: #{tpu_custom_call.1}
  #allocation0 [shape = 'u32[]', space=smem, size = 0x4, offset = 0x4, fixed_abs, tag = 'smem constant byte address 0x4 - core index']
  #allocation1 [shape = 'u32[144,128]{1,0:T(1,128)}', space=vmem, size = 0x12000, scoped, tag = 'internal scratch']
  %s0 = inlined_call_operand.hbm [shape: bf16[16,128], index: 0, kind: input, shape index: {}]
  %s1 = inlined_call_operand.hbm [shape: f32[16,128], index: 1, kind: output, shape index: {}]
  %s2 = sld [smem:[#allocation0]]
  $region18: #{tpu_custom_call.1} parent=0
    _
  %s4 = ssub.s32 1, %s2
  %s5 = scalar_select 0, %s4, %s2
  $region1: #{tpu_custom_call.1} parent=0
    #allocation2 [shape = 'u8[4096]{0}', space=vmem, size = 0x1000, scoped, tag = 'input window, operand 0, single buffered']
    #allocation3 [shape = 's32[1]{0}', space=sflag, size = 0x4, scoped, tag = 'scoped memory for tpu_custom_call.1']
    #allocation4 [shape = 's32[1]{0}', space=sflag, size = 0x4, scoped, tag = 'scoped memory for tpu_custom_call.1']
    #allocation5 [shape = 'u8[8192]{0}', space=vmem, size = 0x2000, scoped, tag = 'output window, operand 0, single buffered']
    %6 = vsyncpa [#allocation3], 0
    %7 = vsyncpa [#allocation4], 0
    // Predicated region
    $region2: #{tpu_custom_call.1} parent=1 // pred_check
      _
    $region3: #{tpu_custom_call.1} parent=1 // pred_check_branch
      %9 = sbr.rel (0) target = $region5
    $region4: #{tpu_custom_call.1} parent=1 // pred_region
      %s11 = ssub.s32 128, 128
      %12 = vsyncadd [#allocation3], %s11
      %s13 = sshll.u32 [#allocation2], 4
      %s14 = int_to_ptr.vmem [resolvable:$true] %s13
      %19 = dma.hbm_to_vmem [thread:$0]  %s0, 128, %s14, [#allocation3], 64, 64, 4
    $region5: #{tpu_custom_call.1} parent=1 // pred_fallthru
      _
    // Predicated region
    $region6: #{tpu_custom_call.1} parent=1 // pred_check
      _
    $region7: #{tpu_custom_call.1} parent=1 // pred_check_branch
      %21 = sbr.rel (0) target = $region9
    $region8: #{tpu_custom_call.1} parent=1 // pred_region
      %22 = dma.done [#allocation3], 128
    $region9: #{tpu_custom_call.1} parent=1 // pred_fallthru
      _
    %v23 = vld [vmem:[#allocation2] sm:$0xf]
    %v24 = vld [vmem:[#allocation2 + $0x4] sm:$0xf]
    %v25 = vunpack.c.l.bf16 %v23
    %v26 = vunpack.c.l.bf16 %v24
    %v27 = vand.u32 2147483647, %v25
    %v28 = vand.u32 2147483647, %v26
    %29 = vadd.xlane.f32.xlu0 %v27
    %v30 = vpop.xlane.xlu0 %29
    %31 = vadd.xlane.f32.xlu0 %v28
    %v32 = vpop.xlane.xlu0 %31
    %v33 = vmax.f32 %v30, 1e-12
    %v34 = vmax.f32 %v32, 1e-12
    %v35 = vrcp.pop %v33
    %v36 = vrcp.pop %v34
    %v37 = vmul.f32 %v25, %v35
    %v38 = vmul.f32 %v26, %v36
    %39 = vst [vmem:[#allocation5] sm:$0xff] %v37
    %40 = vst [vmem:[#allocation5 + $0x8] sm:$0xff] %v38
    // Predicated region
    $region10: #{tpu_custom_call.1} parent=1 // pred_check
      _
    $region11: #{tpu_custom_call.1} parent=1 // pred_check_branch
      %42 = sbr.rel (0) target = $region13
    $region12: #{tpu_custom_call.1} parent=1 // pred_region
      %s44 = ssub.s32 256, 256
      %45 = vsyncadd [#allocation4], %s44
      %s46 = sshll.u32 [#allocation5], 4
      %s47 = int_to_ptr.vmem [resolvable:$true] %s46
      %52 = dma.vmem_to_hbm [thread:$0]  %s47, 256, %s1, [#allocation4], 128, 128, 8
    $region13: #{tpu_custom_call.1} parent=1 // pred_fallthru
      _
    // Predicated region
    $region14: #{tpu_custom_call.1} parent=1 // pred_check
      _
    $region15: #{tpu_custom_call.1} parent=1 // pred_check_branch
      %54 = sbr.rel (0) target = $region17
    $region16: #{tpu_custom_call.1} parent=1 // pred_region
      %55 = dma.done [#allocation4], 256
    $region17: #{tpu_custom_call.1} parent=1 // pred_fallthru
      _
    %56 = vsyncpa [#allocation3], 1
    %57 = vsyncpa [#allocation4], 1

</llo_original>
